<compile_context>
chip_gen: v7x
topology: tpu7x:2x2x1
jax: 0.10.0
libtpu: 0.0.40
codegen_flags: <defaults>
</compile_context>

<pallas_src>
import functools

import jax
import jax.numpy as jnp
from jax.experimental import pallas as pl
from jax.experimental.pallas import tpu as pltpu

LANES = 128
TARGET_TILE_ROWS = 2048  # 2048*128*4B = 1 MiB per f32 input block
MAX_CORES = 2            # v7x has 2 TensorCores; harmless on 1-TC chips


def _round_up(v, m):
    return ((v + m - 1) // m) * m


def _sublane_multiple(dtype):
    # f32 -> 8, bf16 -> 16, int8/uint8 -> 32 (packed sublane tiling).
    return max(8, 32 // jnp.dtype(dtype).itemsize)


def _iou_kernel(x_ref, t_ref, o_ref, *, tile_rows, rows, steps):
    c = pl.program_id(0)  # core shard (parallel)
    j = pl.program_id(1)  # row-tile step within the shard (arbitrary)

    @pl.when(j == 0)
    def _():
        o_ref[...] = jnp.zeros_like(o_ref)

    x = x_ref[...].astype(jnp.float32)
    t = t_ref[...].astype(jnp.float32)

    # Mask rows past the true row count (ragged tail / clamped overrun blocks).
    row_base = (c * steps + j) * tile_rows
    row_ids = jax.lax.broadcasted_iota(jnp.int32, x.shape, 0) + row_base
    valid = row_ids < rows
    x = jnp.where(valid, x, 0.0)
    t = jnp.where(valid, t, 0.0)

    # Reduce the (tile_rows, 128) tile to (8, 128) with pure VPU adds
    # (no cross-lane XLU work) and accumulate into the resident output block.
    groups = tile_rows // 8
    xt = jnp.sum((x * t).reshape(groups, 8, LANES), axis=0)
    xs = jnp.sum((x + t).reshape(groups, 8, LANES), axis=0)
    o_ref[0, 0] += xt
    o_ref[0, 1] += xs


def iou_pallas(inputs, targets, smooth=1.0, *, tile_rows_target=TARGET_TILE_ROWS):
    """IoU = (sum(x*t) + smooth) / (sum(x+t) - sum(x*t) + smooth)."""
    x = jnp.ravel(inputs)
    t = jnp.ravel(targets)
    # Bool masks are not streamed directly; use 1-byte ints instead.
    if x.dtype == jnp.bool_:
        x = x.astype(jnp.int8)
    if t.dtype == jnp.bool_:
        t = t.astype(jnp.int8)

    n = x.shape[0]
    if n == 0:
        return jnp.float32(1.0)  # (0 + smooth) / (0 + smooth)

    # Only pad when numel isn't a multiple of 128 (at most 127 zeros; zeros
    # are neutral for both sums).  Common case: no pad, reshape is a no-copy
    # view of the flat array.
    rem = n % LANES
    if rem:
        x = jnp.pad(x, (0, LANES - rem))
        t = jnp.pad(t, (0, LANES - rem))
    rows = x.shape[0] // LANES
    x2 = x.reshape(rows, LANES)
    t2 = t.reshape(rows, LANES)

    mult = max(_sublane_multiple(x.dtype), _sublane_multiple(t.dtype))
    tile_rows = min(_round_up(tile_rows_target, mult), _round_up(rows, mult))
    n_tiles = pl.cdiv(rows, tile_rows)
    ncores = min(MAX_CORES, n_tiles)
    steps = pl.cdiv(n_tiles, ncores)
    max_tile = n_tiles - 1

    def in_map(c, j):
        # Clamp fully-out-of-range tiles to the last tile; the in-kernel row
        # mask zeroes their contribution.
        return (jnp.minimum(c * steps + j, max_tile), 0)

    partials = pl.pallas_call(
        functools.partial(_iou_kernel, tile_rows=tile_rows, rows=rows, steps=steps),
        out_shape=jax.ShapeDtypeStruct((ncores, 2, 8, LANES), jnp.float32),
        grid_spec=pltpu.PrefetchScalarGridSpec(
            num_scalar_prefetch=0,
            grid=(ncores, steps),
            in_specs=[
                pl.BlockSpec((tile_rows, LANES), in_map),
                pl.BlockSpec((tile_rows, LANES), in_map),
            ],
            out_specs=pl.BlockSpec((1, 2, 8, LANES), lambda c, j: (c, 0, 0, 0)),
        ),
        compiler_params=pltpu.CompilerParams(
            dimension_semantics=("parallel", "arbitrary"),
        ),
    )(x2, t2)

    intersection = jnp.sum(partials[:, 0])
    total = jnp.sum(partials[:, 1])
    union = total - intersection
    smooth = jnp.float32(smooth)
    return (intersection + smooth) / (union + smooth)


def iou_ref(inputs, targets, smooth=1.0):
    x = jnp.ravel(inputs).astype(jnp.float32)
    t = jnp.ravel(targets).astype(jnp.float32)
    intersection = jnp.sum(x * t)
    total = jnp.sum(x + t)
    union = total - intersection
    return (intersection + smooth) / (union + smooth)


if __name__ == "__main__":
    key = jax.random.PRNGKey(0)
    k1, k2, k3, k4 = jax.random.split(key, 4)

    # Primary case: typical segmentation shapes (batch, channels, H, W).
    shape = (2, 4, 16, 16)
    inputs = jax.nn.sigmoid(jax.random.normal(k1, shape, dtype=jnp.float32))
    targets = (jax.random.uniform(k2, shape) > 0.5).astype(jnp.float32)
    result = iou_pallas(inputs, targets, smooth=1.0)
    jax.block_until_ready(result)
    expected = iou_ref(inputs, targets, smooth=1.0)
    assert jnp.allclose(result, expected, rtol=1e-5, atol=1e-5), (result, expected)

    # Ragged case (numel % 128 != 0) exercises the in-kernel tail mask.
    shape2 = (3, 5, 17, 13)
    ri = jax.nn.sigmoid(jax.random.normal(k3, shape2, dtype=jnp.float32))
    rt = (jax.random.uniform(k4, shape2) > 0.5).astype(jnp.float32)
    r = iou_pallas(ri, rt, smooth=1.0)
    e2 = iou_ref(ri, rt, smooth=1.0)
    assert jnp.allclose(r, e2, rtol=1e-5, atol=1e-5), (r, e2)

    # Multi-tile / two-shard case with a small tile target exercises the
    # parallel core axis, the clamped overrun block, and the revisit init.
    shape3 = (5, 8, 32, 32)  # 40960 elems -> 320 rows -> 5 tiles of 64 rows
    mi = jax.nn.sigmoid(jax.random.normal(k3, shape3, dtype=jnp.float32))
    mt = (jax.random.uniform(k4, shape3) > 0.5).astype(jnp.float32)
    m = iou_pallas(mi, mt, smooth=1.0, tile_rows_target=64)
    e3 = iou_ref(mi, mt, smooth=1.0)
    assert jnp.allclose(m, e3, rtol=1e-5, atol=1e-5), (m, e3)

    print("KERNEL_OK")
</pallas_src>

<mosaic_0001>
module attributes {stable_mosaic.version = 11 : i64} {
  func.func @_iou_kernel(%arg0: i32, %arg1: i32, %arg2: memref<16x128xf32, #tpu.memory_space<vmem>>, %arg3: memref<16x128xf32, #tpu.memory_space<vmem>>, %arg4: memref<1x2x8x128xf32, #tpu.memory_space<vmem>>) attributes {dimension_semantics = [#tpu.dimension_semantics<parallel>, #tpu.dimension_semantics<arbitrary>], iteration_bounds = array<i64: 1, 1>, scalar_prefetch = 0 : i64, scratch_operands = 0 : i64, tpu.core_type = #tpu.core_type<tc>, window_params = [{transform_indices = @transform_0, window_bounds = array<i64: 16, 128>}, {transform_indices = @transform_1, window_bounds = array<i64: 16, 128>}, {transform_indices = @transform_2, window_bounds = array<i64: 1, 2, 8, 128>}]} {
    %c0_i32 = arith.constant 0 : i32
    %0 = arith.cmpi eq, %arg1, %c0_i32 : i32
    %1 = arith.extui %0 : i1 to i32
    %c0_i32_0 = arith.constant 0 : i32
    %2 = arith.cmpi ne, %1, %c0_i32_0 : i32
    scf.if %2 {
      %cst_23 = arith.constant 0.000000e+00 : f32
      %35 = vector.broadcast %cst_23 : f32 to vector<1x2x8x128xf32>
      %c0_24 = arith.constant 0 : index
      %c0_25 = arith.constant 0 : index
      %c0_26 = arith.constant 0 : index
      %c0_27 = arith.constant 0 : index
      %36 = vector.load %arg4[%c0_24, %c0_25, %c0_26, %c0_27] : memref<1x2x8x128xf32, #tpu.memory_space<vmem>>, vector<1x2x8x128xf32>
      tpu.vector_store %arg4[%c0_24, %c0_25, %c0_26, %c0_27], %35 {strides = array<i32>} : memref<1x2x8x128xf32, #tpu.memory_space<vmem>>, vector<1x2x8x128xf32>,
    } else {
    }
    %c0 = arith.constant 0 : index
    %c0_1 = arith.constant 0 : index
    %3 = vector.load %arg2[%c0, %c0_1] : memref<16x128xf32, #tpu.memory_space<vmem>>, vector<16x128xf32>
    %c0_2 = arith.constant 0 : index
    %c0_3 = arith.constant 0 : index
    %4 = vector.load %arg3[%c0_2, %c0_3] : memref<16x128xf32, #tpu.memory_space<vmem>>, vector<16x128xf32>
    %c1_i32 = arith.constant 1 : i32
    %5 = arith.muli %arg0, %c1_i32 : i32
    %6 = arith.addi %5, %arg1 : i32
    %c16_i32 = arith.constant 16 : i32
    %7 = arith.muli %6, %c16_i32 : i32
    %8 = tpu.iota {dimensions = array<i32: 0>} : vector<16x128xi32>
    %9 = vector.broadcast %7 : i32 to vector<16x128xi32>
    %10 = arith.addi %8, %9 : vector<16x128xi32>
    %c16_i32_4 = arith.constant 16 : i32
    %11 = vector.broadcast %c16_i32_4 : i32 to vector<16x128xi32>
    %12 = arith.cmpi slt, %10, %11 : vector<16x128xi32>
    %cst = arith.constant 0.000000e+00 : f32
    %13 = vector.broadcast %cst : f32 to vector<16x128xf32>
    %14 = arith.select %12, %3, %13 : vector<16x128xi1>, vector<16x128xf32>
    %cst_5 = arith.constant 0.000000e+00 : f32
    %15 = vector.broadcast %cst_5 : f32 to vector<16x128xf32>
    %16 = arith.select %12, %4, %15 : vector<16x128xi1>, vector<16x128xf32>
    %17 = arith.mulf %14, %16 : vector<16x128xf32>
    %18 = vector.shape_cast %17 : vector<16x128xf32> to vector<2x8x128xf32>
    %cst_6 = arith.constant dense<0.000000e+00> : vector<8x128xf32>
    %19 = vector.multi_reduction <add>, %18, %cst_6 [0] : vector<2x8x128xf32> to vector<8x128xf32>
    %20 = arith.addf %14, %16 : vector<16x128xf32>
    %21 = vector.shape_cast %20 : vector<16x128xf32> to vector<2x8x128xf32>
    %cst_7 = arith.constant dense<0.000000e+00> : vector<8x128xf32>
    %22 = vector.multi_reduction <add>, %21, %cst_7 [0] : vector<2x8x128xf32> to vector<8x128xf32>
    %c0_8 = arith.constant 0 : index
    %c0_9 = arith.constant 0 : index
    %c0_10 = arith.constant 0 : index
    %c0_11 = arith.constant 0 : index
    %23 = vector.load %arg4[%c0_8, %c0_9, %c0_10, %c0_11] : memref<1x2x8x128xf32, #tpu.memory_space<vmem>>, vector<1x1x8x128xf32>
    %24 = vector.shape_cast %23 : vector<1x1x8x128xf32> to vector<8x128xf32>
    %25 = arith.addf %24, %19 : vector<8x128xf32>
    %c0_12 = arith.constant 0 : index
    %c0_13 = arith.constant 0 : index
    %c0_14 = arith.constant 0 : index
    %c0_15 = arith.constant 0 : index
    %26 = vector.load %arg4[%c0_12, %c0_13, %c0_14, %c0_15] : memref<1x2x8x128xf32, #tpu.memory_space<vmem>>, vector<1x1x8x128xf32>
    %27 = vector.shape_cast %26 : vector<1x1x8x128xf32> to vector<8x128xf32>
    %28 = vector.shape_cast %25 : vector<8x128xf32> to vector<1x1x8x128xf32>
    tpu.vector_store %arg4[%c0_12, %c0_13, %c0_14, %c0_15], %28 {strides = array<i32>} : memref<1x2x8x128xf32, #tpu.memory_space<vmem>>, vector<1x1x8x128xf32>,
    %c0_16 = arith.constant 0 : index
    %c1 = arith.constant 1 : index
    %c0_17 = arith.constant 0 : index
    %c0_18 = arith.constant 0 : index
    %29 = vector.load %arg4[%c0_16, %c1, %c0_17, %c0_18] : memref<1x2x8x128xf32, #tpu.memory_space<vmem>>, vector<1x1x8x128xf32>
    %30 = vector.shape_cast %29 : vector<1x1x8x128xf32> to vector<8x128xf32>
    %31 = arith.addf %30, %22 : vector<8x128xf32>
    %c0_19 = arith.constant 0 : index
    %c1_20 = arith.constant 1 : index
    %c0_21 = arith.constant 0 : index
    %c0_22 = arith.constant 0 : index
    %32 = vector.load %arg4[%c0_19, %c1_20, %c0_21, %c0_22] : memref<1x2x8x128xf32, #tpu.memory_space<vmem>>, vector<1x1x8x128xf32>
    %33 = vector.shape_cast %32 : vector<1x1x8x128xf32> to vector<8x128xf32>
    %34 = vector.shape_cast %31 : vector<8x128xf32> to vector<1x1x8x128xf32>
    tpu.vector_store %arg4[%c0_19, %c1_20, %c0_21, %c0_22], %34 {strides = array<i32>} : memref<1x2x8x128xf32, #tpu.memory_space<vmem>>, vector<1x1x8x128xf32>,
    return
  }
  func.func @transform_0(%arg0: i32, %arg1: i32) -> (i32, i32) {
    %c1_i32 = arith.constant 1 : i32
    %0 = arith.muli %arg0, %c1_i32 : i32
    %1 = arith.addi %0, %arg1 : i32
    %c0_i32 = arith.constant 0 : i32
    %2 = arith.minsi %1, %c0_i32 : i32
    %c0_i32_0 = arith.constant 0 : i32
    %c0_i32_1 = arith.constant 0 : i32
    return %2, %c0_i32_0 : i32, i32
  }
  func.func @transform_1(%arg0: i32, %arg1: i32) -> (i32, i32) {
    %c1_i32 = arith.constant 1 : i32
    %0 = arith.muli %arg0, %c1_i32 : i32
    %1 = arith.addi %0, %arg1 : i32
    %c0_i32 = arith.constant 0 : i32
    %2 = arith.minsi %1, %c0_i32 : i32
    %c0_i32_0 = arith.constant 0 : i32
    %c0_i32_1 = arith.constant 0 : i32
    return %2, %c0_i32_0 : i32, i32
  }
  func.func @transform_2(%arg0: i32, %arg1: i32) -> (i32, i32, i32, i32) {
    %c0_i32 = arith.constant 0 : i32
    %c0_i32_0 = arith.constant 0 : i32
    %c0_i32_1 = arith.constant 0 : i32
    %c0_i32_2 = arith.constant 0 : i32
    return %arg0, %c0_i32, %c0_i32_0, %c0_i32_1 : i32, i32, i32, i32
  }
}

</mosaic_0001>

<llo_original>
// kernel: tpu_custom_call.1
$region0: #{tpu_custom_call.1}
  #allocation0 [shape = 'u32[]', space=smem, size = 0x4, offset = 0x4, fixed_abs, tag = 'smem constant byte address 0x4 - core index']
  #allocation1 [shape = 'u32[144,128]{1,0:T(1,128)}', space=vmem, size = 0x12000, scoped, tag = 'internal scratch']
  %s0 = inlined_call_operand.hbm [shape: f32[16,128], index: 0, kind: input, shape index: {}]
  %s1 = inlined_call_operand.hbm [shape: f32[16,128], index: 1, kind: input, shape index: {}]
  %s2 = inlined_call_operand.hbm [shape: f32[1,2,8,128], index: 2, kind: output, shape index: {}]
  %s3 = sld [smem:[#allocation0]]
  $region30: #{tpu_custom_call.1} parent=0
    _
  %s5 = ssub.s32 1, %s3
  %s6 = scalar_select 0, %s5, %s3
  $region1: #{tpu_custom_call.1} parent=0
    #allocation2 [shape = 'u8[8192]{0}', space=vmem, size = 0x2000, scoped, tag = 'input window, operand 0, single buffered']
    #allocation3 [shape = 's32[1]{0}', space=sflag, size = 0x4, scoped, tag = 'scoped memory for tpu_custom_call.1']
    #allocation4 [shape = 's32[1]{0}', space=sflag, size = 0x4, scoped, tag = 'scoped memory for tpu_custom_call.1']
    #allocation5 [shape = 'u8[8192]{0}', space=vmem, size = 0x2000, scoped, tag = 'input window, operand 1, single buffered']
    #allocation6 [shape = 's32[1]{0}', space=sflag, size = 0x4, scoped, tag = 'scoped memory for tpu_custom_call.1']
    #allocation7 [shape = 'u8[8192]{0}', space=vmem, size = 0x2000, scoped, tag = 'output window, operand 0, single buffered']
    %7 = vsyncpa [#allocation3], 0
    %8 = vsyncpa [#allocation6], 0
    %9 = vsyncpa [#allocation4], 0
    // Predicated region
    $region2: #{tpu_custom_call.1} parent=1 // pred_check
      _
    $region3: #{tpu_custom_call.1} parent=1 // pred_check_branch
      %11 = sbr.rel (0) target = $region5
    $region4: #{tpu_custom_call.1} parent=1 // pred_region
      %s12 = sadd.s32 0, 0
      %p13 = scmp.lt.s32.totalorder %s12, 0
      %s14 = scalar_select %p13, %s12, 0
      %s15 = smul.u32 2, %s14
      %s17 = ssub.s32 256, 256
      %18 = vsyncadd [#allocation3], %s17
      %s19 = smul.addr %s15, 128
      %s20 = scalar_lea.hbm %s0, %s19
      %s21 = sshll.u32 [#allocation2], 4
      %s22 = int_to_ptr.vmem [resolvable:$true] %s21
      %27 = dma.hbm_to_vmem [thread:$0]  %s20, 256, %s22, [#allocation3], 128, 128, 8
    $region5: #{tpu_custom_call.1} parent=1 // pred_fallthru
      _
    // Predicated region
    $region6: #{tpu_custom_call.1} parent=1 // pred_check
      _
    $region7: #{tpu_custom_call.1} parent=1 // pred_check_branch
      %29 = sbr.rel (0) target = $region9
    $region8: #{tpu_custom_call.1} parent=1 // pred_region
      %s30 = sadd.s32 0, 0
      %p31 = scmp.lt.s32.totalorder %s30, 0
      %s32 = scalar_select %p31, %s30, 0
      %s33 = smul.u32 2, %s32
      %s35 = ssub.s32 256, 256
      %36 = vsyncadd [#allocation6], %s35
      %s37 = smul.addr %s33, 128
      %s38 = scalar_lea.hbm %s1, %s37
      %s39 = sshll.u32 [#allocation5], 4
      %s40 = int_to_ptr.vmem [resolvable:$true] %s39
      %45 = dma.hbm_to_vmem [thread:$0]  %s38, 256, %s40, [#allocation6], 128, 128, 8
    $region9: #{tpu_custom_call.1} parent=1 // pred_fallthru
      _
    // Predicated region
    $region10: #{tpu_custom_call.1} parent=1 // pred_check
      _
    $region11: #{tpu_custom_call.1} parent=1 // pred_check_branch
      %47 = sbr.rel (0) target = $region13
    $region12: #{tpu_custom_call.1} parent=1 // pred_region
      %48 = dma.done [#allocation3], 256
    $region13: #{tpu_custom_call.1} parent=1 // pred_fallthru
      _
    // Predicated region
    $region14: #{tpu_custom_call.1} parent=1 // pred_check
      _
    $region15: #{tpu_custom_call.1} parent=1 // pred_check_branch
      %50 = sbr.rel (0) target = $region17
    $region16: #{tpu_custom_call.1} parent=1 // pred_region
      %51 = dma.done [#allocation6], 256
    $region17: #{tpu_custom_call.1} parent=1 // pred_fallthru
      _
    %s52 = sadd.s32 0, 0
    %p53 = scmp.lt.s32.totalorder %s52, 0
    %s54 = scalar_select %p53, %s52, 0
    %s55 = smul.u32 2, %s54
    %s56 = sadd.s32 0, 0
    %p57 = scmp.lt.s32.totalorder %s56, 0
    %s58 = scalar_select %p57, %s56, 0
    %s59 = smul.u32 2, %s58
    %p60 = scmp.eq.s32.totalorder 0, 0
    // Predicated region
    $region18: #{tpu_custom_call.1} parent=1 // pred_check
      %p61 = pneg %p60
    $region19: #{tpu_custom_call.1} parent=1 // pred_check_branch
      %63 = sbr.rel (%p61) target = $region21
    $region20: #{tpu_custom_call.1} parent=1 // pred_region
      %64 = vst [vmem:[#allocation7] sm:$0xff] 0.0
      %65 = vst [vmem:[#allocation7 + $0x8] sm:$0xff] 0.0
    $region21: #{tpu_custom_call.1} parent=1 // pred_fallthru
      _
    %v66 = vld [vmem:[#allocation2] sm:$0xff]
    %v67 = vld [vmem:[#allocation2 + $0x8] sm:$0xff]
    %v68 = vld [vmem:[#allocation5] sm:$0xff]
    %v69 = vld [vmem:[#allocation5 + $0x8] sm:$0xff]
    %s70 = sadd.s32 0, 0
    %s71 = smul.u32 %s70, 16
    %v72 = vlaneseq
    %v73 = vshrl.u32 %v72, 7
    %v74 = vadd.s32 %v73, 8
    %v75 = vstv %s71
    %v76 = vadd.s32 %v73, %v75
    %v77 = vadd.s32 %v74, %v75
    %vm78 = vcmp.lt.s32.totalorder %v76, 16
    %vm79 = vcmp.lt.s32.totalorder %v77, 16
    %v80 = vsel %vm78, %v66, 0.0
    %v81 = vsel %vm79, %v67, 0.0
    %v82 = vsel %vm78, %v68, 0.0
    %v83 = vsel %vm79, %v69, 0.0
    %v84 = vmul.f32 %v80, %v82
    %v85 = vmul.f32 %v81, %v83
    %v86 = vadd.f32 %v84, %v85
    %v87 = vadd.f32 %v80, %v82
    %v88 = vadd.f32 %v81, %v83
    %v89 = vadd.f32 %v87, %v88
    %v90 = vld [vmem:[#allocation7] sm:$0xff]
    %v91 = vadd.f32 %v90, %v86
    %92 = vst [vmem:[#allocation7] sm:$0xff] %v91
    %s93 = scalar_lea.vmem [#allocation7], 8
    %v94 = vld [vmem:[%s93] sm:$0xff]
    %v95 = vadd.f32 %v94, %v89
    %96 = vst [vmem:[%s93] sm:$0xff] %v95
    // Predicated region
    $region22: #{tpu_custom_call.1} parent=1 // pred_check
      _
    $region23: #{tpu_custom_call.1} parent=1 // pred_check_branch
      %98 = sbr.rel (0) target = $region25
    $region24: #{tpu_custom_call.1} parent=1 // pred_region
      %s100 = ssub.s32 256, 256
      %101 = vsyncadd [#allocation4], %s100
      %s102 = sshll.u32 [#allocation7], 4
      %s103 = int_to_ptr.vmem [resolvable:$true] %s102
      %108 = dma.vmem_to_hbm [thread:$0]  %s103, 256, %s2, [#allocation4], 128, 128, 8
    $region25: #{tpu_custom_call.1} parent=1 // pred_fallthru
      _
    // Predicated region
    $region26: #{tpu_custom_call.1} parent=1 // pred_check
      _
    $region27: #{tpu_custom_call.1} parent=1 // pred_check_branch
      %110 = sbr.rel (0) target = $region29
    $region28: #{tpu_custom_call.1} parent=1 // pred_region
      %111 = dma.done [#allocation4], 256
    $region29: #{tpu_custom_call.1} parent=1 // pred_fallthru
      _
    %112 = vsyncpa [#allocation3], 1
    %113 = vsyncpa [#allocation6], 1
    %114 = vsyncpa [#allocation4], 1

</llo_original>
